<compile_context>
chip_gen: v7x
topology: tpu7x:2x2x1
jax: 0.10.0
libtpu: 0.0.40
codegen_flags: <defaults>
</compile_context>

<pallas_src>
import functools
import math

import jax
import jax.numpy as jnp
from jax import lax
from jax.experimental import pallas as pl
from jax.experimental.pallas import tpu as pltpu

_MASK_VALUE = -1e30  # large finite negative; avoids exp(-inf - (-inf)) NaNs
_VMEM_LIMIT = 48 * 1024 * 1024  # stays inside v7x's 64 MiB physical VMEM


def _fit_tile(dim, target):
    """Largest legal tile: `target` if it divides dim, else the full extent.

    Full extent is always a legal block shape; the `target` values used below
    are multiples of (8, 128) so sub-extent tiles respect TPU tiling rules.
    """
    if dim <= target:
        return dim
    if dim % target == 0:
        return target
    return dim


# ----------------------------------------------------------------------------
# Linear: out = x @ W + b   (W already transposed to (in, out) by the wrapper)
# ----------------------------------------------------------------------------
def _linear_kernel_acc(x_ref, w_ref, b_ref, o_ref, acc_ref):
    @pl.when(pl.program_id(2) == 0)
    def _init():
        acc_ref[...] = jnp.zeros(acc_ref.shape, jnp.float32)

    acc_ref[...] += jnp.dot(x_ref[...], w_ref[...],
                            preferred_element_type=jnp.float32)

    @pl.when(pl.program_id(2) == pl.num_programs(2) - 1)
    def _finalize():
        out = acc_ref[...] + b_ref[...].astype(jnp.float32)
        o_ref[...] = out.astype(o_ref.dtype)


def _linear_kernel_single_k(x_ref, w_ref, b_ref, o_ref):
    # K reduction fits in one tile: no scratch accumulator round-trip needed.
    acc = jnp.dot(x_ref[...], w_ref[...], preferred_element_type=jnp.float32)
    o_ref[...] = (acc + b_ref[...].astype(jnp.float32)).astype(o_ref.dtype)


def _linear(x2d, w_t, b_row, *, out_dtype, tm=256, tn=256, tk=512):
    M, K = x2d.shape
    K2, N = w_t.shape
    assert K == K2 and b_row.shape == (1, N)
    tm = _fit_tile(M, tm)
    tn = _fit_tile(N, tn)
    tk = _fit_tile(K, tk)
    kt = K // tk

    if kt == 1:
        # common stable-diffusion case (d_embed <= 1280): single-K fast path
        return pl.pallas_call(
            _linear_kernel_single_k,
            out_shape=jax.ShapeDtypeStruct((M, N), out_dtype),
            grid=(M // tm, N // tn),
            in_specs=[
                pl.BlockSpec((tm, K), lambda i, j: (i, 0)),
                pl.BlockSpec((K, tn), lambda i, j: (0, j)),
                pl.BlockSpec((1, tn), lambda i, j: (0, j)),
            ],
            out_specs=pl.BlockSpec((tm, tn), lambda i, j: (i, j)),
            compiler_params=pltpu.CompilerParams(
                dimension_semantics=("parallel", "parallel"),
                vmem_limit_bytes=_VMEM_LIMIT),
        )(x2d, w_t, b_row)

    return pl.pallas_call(
        _linear_kernel_acc,
        out_shape=jax.ShapeDtypeStruct((M, N), out_dtype),
        grid=(M // tm, N // tn, kt),
        in_specs=[
            pl.BlockSpec((tm, tk), lambda i, j, k: (i, k)),
            pl.BlockSpec((tk, tn), lambda i, j, k: (k, j)),
            pl.BlockSpec((1, tn), lambda i, j, k: (0, j)),
        ],
        out_specs=pl.BlockSpec((tm, tn), lambda i, j, k: (i, j)),
        scratch_shapes=[pltpu.VMEM((tm, tn), jnp.float32)],
        compiler_params=pltpu.CompilerParams(
            dimension_semantics=("parallel", "parallel", "arbitrary"),
            vmem_limit_bytes=_VMEM_LIMIT),
    )(x2d, w_t, b_row)


# ----------------------------------------------------------------------------
# Flash attention: online softmax over KV tiles, per (batch*head, q-tile)
# ----------------------------------------------------------------------------
def _flash_attn_kernel(q_ref, kt_ref, v_ref, o_ref, m_sc, l_sc, acc_sc,
                       *, scale, causal, tq, tkv):
    qi = pl.program_id(1)
    ki = pl.program_id(2)

    @pl.when(ki == 0)
    def _init():
        m_sc[...] = jnp.full(m_sc.shape, _MASK_VALUE, jnp.float32)
        l_sc[...] = jnp.zeros(l_sc.shape, jnp.float32)
        acc_sc[...] = jnp.zeros(acc_sc.shape, jnp.float32)

    def _compute():
        # fold the 1/sqrt(d_head) scale into q (tq x d_head mults, not tq x tkv)
        q = (q_ref[...].astype(jnp.float32) * scale).astype(kt_ref.dtype)
        # K arrives pre-transposed as (d_head, tkv): plain MXU matmul, no relayout.
        s = jnp.dot(q, kt_ref[...], preferred_element_type=jnp.float32)  # (tq, tkv)

        if causal:
            row = qi * tq + lax.broadcasted_iota(jnp.int32, (tq, tkv), 0)
            col = ki * tkv + lax.broadcasted_iota(jnp.int32, (tq, tkv), 1)
            s = jnp.where(col > row, _MASK_VALUE, s)

        m_prev = m_sc[...]
        m_new = jnp.maximum(m_prev, jnp.max(s, axis=-1, keepdims=True))
        alpha = jnp.exp(m_prev - m_new)
        p = jnp.exp(s - m_new)                                           # f32
        l_sc[...] = alpha * l_sc[...] + jnp.sum(p, axis=-1, keepdims=True)
        acc_sc[...] = alpha * acc_sc[...] + jnp.dot(
            p.astype(v_ref.dtype), v_ref[...],
            preferred_element_type=jnp.float32)
        m_sc[...] = m_new

    if causal:
        # skip KV tiles that lie entirely above the diagonal for this q tile
        pl.when(ki * tkv <= qi * tq + (tq - 1))(_compute)
    else:
        _compute()

    @pl.when(ki == pl.num_programs(2) - 1)
    def _finalize():
        inv_l = pl.reciprocal(l_sc[...], approx=True)     # deferred normalization
        o_ref[...] = (acc_sc[...] * inv_l).astype(o_ref.dtype)


def _flash_attention(q, kT, v, *, causal, out_dtype, tq=256, tkv=256):
    BH, S, d_head = q.shape
    assert kT.shape == (BH, d_head, S) and v.shape == (BH, S, d_head)
    tq = _fit_tile(S, tq)
    tkv = _fit_tile(S, tkv)
    grid = (BH, S // tq, S // tkv)
    kernel = functools.partial(_flash_attn_kernel,
                               scale=1.0 / math.sqrt(d_head),
                               causal=bool(causal), tq=tq, tkv=tkv)
    return pl.pallas_call(
        kernel,
        out_shape=jax.ShapeDtypeStruct((BH, S, d_head), out_dtype),
        grid=grid,
        in_specs=[
            pl.BlockSpec((None, tq, d_head), lambda bh, qi, ki: (bh, qi, 0)),
            pl.BlockSpec((None, d_head, tkv), lambda bh, qi, ki: (bh, 0, ki)),
            pl.BlockSpec((None, tkv, d_head), lambda bh, qi, ki: (bh, ki, 0)),
        ],
        out_specs=pl.BlockSpec((None, tq, d_head),
                               lambda bh, qi, ki: (bh, qi, 0)),
        scratch_shapes=[
            pltpu.VMEM((tq, 1), jnp.float32),       # running max  m
            pltpu.VMEM((tq, 1), jnp.float32),       # running sum  l
            pltpu.VMEM((tq, d_head), jnp.float32),  # running acc
        ],
        compiler_params=pltpu.CompilerParams(
            dimension_semantics=("parallel", "parallel", "arbitrary"),
            vmem_limit_bytes=_VMEM_LIMIT),
    )(q, kT, v)


# ----------------------------------------------------------------------------
# Full module: in_proj -> per-head flash attention -> out_proj
# ----------------------------------------------------------------------------
def self_attention(x, w_in, b_in, w_out, b_out, *, n_heads, causal_mask=False,
                   compute_dtype=jnp.bfloat16):
    """x: (B, S, D); w_in: (3D, D), w_out: (D, D) in torch nn.Linear layout."""
    B, S, D = x.shape
    assert D % n_heads == 0
    d_head = D // n_heads

    # --- in_proj (tiled GEMM, bf16 operands, f32 accumulation) ---
    x2d = x.reshape(B * S, D).astype(compute_dtype)
    w_in_t = jnp.transpose(w_in).astype(compute_dtype)           # (D, 3D)
    b_in_row = b_in.reshape(1, 3 * D).astype(jnp.float32)
    qkv = _linear(x2d, w_in_t, b_in_row, out_dtype=compute_dtype)  # (B*S, 3D)

    # wrapper-side layout plumbing only (no in-kernel transposes):
    qkv = qkv.reshape(B, S, 3, n_heads, d_head)
    q = qkv[:, :, 0].transpose(0, 2, 1, 3).reshape(B * n_heads, S, d_head)
    kT = qkv[:, :, 1].transpose(0, 2, 3, 1).reshape(B * n_heads, d_head, S)
    v = qkv[:, :, 2].transpose(0, 2, 1, 3).reshape(B * n_heads, S, d_head)

    # --- flash attention (grid over B*H, q-tiles, kv-tiles) ---
    ctx = _flash_attention(q, kT, v, causal=causal_mask, out_dtype=compute_dtype)

    # merge heads back (wrapper-side), then out_proj.
    # TODO(synk): for production D not a multiple of 128, pad D here to keep the
    # out_proj output lane-dense.
    ctx2d = (ctx.reshape(B, n_heads, S, d_head)
                .transpose(0, 2, 1, 3)
                .reshape(B * S, D)
                .astype(compute_dtype))
    w_out_t = jnp.transpose(w_out).astype(compute_dtype)         # (D, D)
    b_out_row = b_out.reshape(1, D).astype(jnp.float32)
    out2d = _linear(ctx2d, w_out_t, b_out_row, out_dtype=x.dtype)
    return out2d.reshape(B, S, D)


# ----------------------------------------------------------------------------
# Pure-JAX reference mirroring the PyTorch forward
# ----------------------------------------------------------------------------
def _reference(x, w_in, b_in, w_out, b_out, n_heads, causal):
    B, S, D = x.shape
    d_head = D // n_heads
    qkv = x @ w_in.T + b_in
    q, k, v = jnp.split(qkv, 3, axis=-1)

    def heads(t):
        return t.reshape(B, S, n_heads, d_head).transpose(0, 2, 1, 3)

    q, k, v = heads(q), heads(k), heads(v)
    w = jnp.einsum("bhqd,bhkd->bhqk", q, k) / math.sqrt(d_head)
    if causal:
        mask = jnp.triu(jnp.ones((S, S), dtype=bool), k=1)
        w = jnp.where(mask[None, None], -jnp.inf, w)
    w = jax.nn.softmax(w, axis=-1)
    o = jnp.einsum("bhqk,bhkd->bhqd", w, v)
    o = o.transpose(0, 2, 1, 3).reshape(B, S, D)
    return o @ w_out.T + b_out


if __name__ == "__main__":
    B, S, D, H = 2, 8, 32, 4

    key = jax.random.PRNGKey(0)
    k_x, k_wi, k_bi, k_wo, k_bo = jax.random.split(key, 5)

    x = jax.random.normal(k_x, (B, S, D), dtype=jnp.float32)
    w_in = jax.random.normal(k_wi, (3 * D, D), dtype=jnp.float32) * (1.0 / math.sqrt(D))
    b_in = jax.random.normal(k_bi, (3 * D,), dtype=jnp.float32) * 0.02
    w_out = jax.random.normal(k_wo, (D, D), dtype=jnp.float32) * (1.0 / math.sqrt(D))
    b_out = jax.random.normal(k_bo, (D,), dtype=jnp.float32) * 0.02

    ref_causal = _reference(x, w_in, b_in, w_out, b_out, H, causal=True)
    ref_plain = _reference(x, w_in, b_in, w_out, b_out, H, causal=False)

    # f32 compute path: strict check (causal and non-causal)
    out = self_attention(x, w_in, b_in, w_out, b_out, n_heads=H,
                         causal_mask=True, compute_dtype=jnp.float32)
    out = jax.block_until_ready(out)
    assert out.shape == (B, S, D)
    assert jnp.allclose(out, ref_causal, atol=1e-2, rtol=1e-2), "causal f32 mismatch"

    out_nc = self_attention(x, w_in, b_in, w_out, b_out, n_heads=H,
                            causal_mask=False, compute_dtype=jnp.float32)
    out_nc = jax.block_until_ready(out_nc)
    assert jnp.allclose(out_nc, ref_plain, atol=1e-2, rtol=1e-2), "non-causal f32 mismatch"

    # bf16 MXU-operand path (production default): run + loose sanity check
    out_bf16 = self_attention(x, w_in, b_in, w_out, b_out, n_heads=H,
                              causal_mask=True)
    out_bf16 = jax.block_until_ready(out_bf16)
    assert out_bf16.shape == (B, S, D)
    assert bool(jnp.all(jnp.isfinite(out_bf16)))
    assert float(jnp.max(jnp.abs(out_bf16 - ref_causal))) < 0.25, "bf16 path diverged"

    print("KERNEL_OK")
</pallas_src>

<mosaic_0001>
module attributes {stable_mosaic.version = 11 : i64} {
  func.func @_linear_kernel_single_k(%arg0: i32, %arg1: i32, %arg2: memref<16x32xf32, #tpu.memory_space<vmem>>, %arg3: memref<32x96xf32, #tpu.memory_space<vmem>>, %arg4: memref<1x96xf32, #tpu.memory_space<vmem>>, %arg5: memref<16x96xf32, #tpu.memory_space<vmem>>) attributes {dimension_semantics = [#tpu.dimension_semantics<parallel>, #tpu.dimension_semantics<parallel>], iteration_bounds = array<i64: 1, 1>, scalar_prefetch = 0 : i64, scratch_operands = 0 : i64, tpu.core_type = #tpu.core_type<tc>, window_params = [{transform_indices = @transform_0, window_bounds = array<i64: 16, 32>}, {transform_indices = @transform_1, window_bounds = array<i64: 32, 96>}, {transform_indices = @transform_2, window_bounds = array<i64: 1, 96>}, {transform_indices = @transform_3, window_bounds = array<i64: 16, 96>}]} {
    %c0 = arith.constant 0 : index
    %c0_0 = arith.constant 0 : index
    %0 = vector.load %arg2[%c0, %c0_0] : memref<16x32xf32, #tpu.memory_space<vmem>>, vector<16x32xf32>
    %c0_1 = arith.constant 0 : index
    %c0_2 = arith.constant 0 : index
    %1 = vector.load %arg3[%c0_1, %c0_2] : memref<32x96xf32, #tpu.memory_space<vmem>>, vector<32x96xf32>
    %cst = arith.constant dense<0.000000e+00> : vector<16x96xf32>
    %2 = tpu.matmul %0, %1, %cst {dimension_numbers = #tpu.dot_dimension_numbers<[1], [0], [0], [1], [0, 0, 1, 1], [], []>} : vector<16x32xf32>, vector<32x96xf32>, vector<16x96xf32> -> vector<16x96xf32>
    %c0_3 = arith.constant 0 : index
    %c0_4 = arith.constant 0 : index
    %3 = vector.load %arg4[%c0_3, %c0_4] : memref<1x96xf32, #tpu.memory_space<vmem>>, vector<1x96xf32>
    %4 = vector.broadcast %3 : vector<1x96xf32> to vector<16x96xf32>
    %5 = arith.addf %2, %4 : vector<16x96xf32>
    %c0_5 = arith.constant 0 : index
    %c0_6 = arith.constant 0 : index
    %6 = vector.load %arg5[%c0_5, %c0_6] : memref<16x96xf32, #tpu.memory_space<vmem>>, vector<16x96xf32>
    tpu.vector_store %arg5[%c0_5, %c0_6], %5 {strides = array<i32>} : memref<16x96xf32, #tpu.memory_space<vmem>>, vector<16x96xf32>,
    return
  }
  func.func @transform_0(%arg0: i32, %arg1: i32) -> (i32, i32) {
    %c0_i32 = arith.constant 0 : i32
    %c0_i32_0 = arith.constant 0 : i32
    return %arg0, %c0_i32 : i32, i32
  }
  func.func @transform_1(%arg0: i32, %arg1: i32) -> (i32, i32) {
    %c0_i32 = arith.constant 0 : i32
    %c0_i32_0 = arith.constant 0 : i32
    return %c0_i32, %arg1 : i32, i32
  }
  func.func @transform_2(%arg0: i32, %arg1: i32) -> (i32, i32) {
    %c0_i32 = arith.constant 0 : i32
    %c0_i32_0 = arith.constant 0 : i32
    return %c0_i32, %arg1 : i32, i32
  }
  func.func @transform_3(%arg0: i32, %arg1: i32) -> (i32, i32) {
    %c0_i32 = arith.constant 0 : i32
    return %arg0, %arg1 : i32, i32
  }
}

</mosaic_0001>

<llo_original>
// kernel: tpu_custom_call.1
$region0: #{tpu_custom_call.1}
  #allocation0 [shape = 'u32[]', space=smem, size = 0x4, offset = 0x4, fixed_abs, tag = 'smem constant byte address 0x4 - core index']
  #allocation1 [shape = 'u32[144,128]{1,0:T(1,128)}', space=vmem, size = 0x12000, scoped, tag = 'internal scratch']
  %s0 = inlined_call_operand.hbm [shape: f32[16,32], index: 0, kind: input, shape index: {}]
  %s1 = inlined_call_operand.hbm [shape: f32[32,96], index: 1, kind: input, shape index: {}]
  %s2 = inlined_call_operand.vmem [shape: f32[1,96], index: 2, kind: input, shape index: {}]
  %s3 = inlined_call_operand.hbm [shape: f32[16,96], index: 3, kind: output, shape index: {}]
  %s4 = sld [smem:[#allocation0]]
  $region30: #{tpu_custom_call.1} parent=0
    _
  %s6 = ssub.s32 1, %s4
  %s7 = scalar_select 0, %s6, %s4
  $region1: #{tpu_custom_call.1} parent=0
    #allocation2 [shape = 'u8[8192]{0}', space=vmem, size = 0x2000, scoped, tag = 'input window, operand 0, single buffered']
    #allocation3 [shape = 's32[1]{0}', space=sflag, size = 0x4, scoped, tag = 'scoped memory for tpu_custom_call.1']
    #allocation4 [shape = 's32[1]{0}', space=sflag, size = 0x4, scoped, tag = 'scoped memory for tpu_custom_call.1']
    #allocation5 [shape = 'u8[16384]{0}', space=vmem, size = 0x4000, scoped, tag = 'input window, operand 1, single buffered']
    #allocation6 [shape = 's32[1]{0}', space=sflag, size = 0x4, scoped, tag = 'scoped memory for tpu_custom_call.1']
    #allocation7 [shape = 'u8[8192]{0}', space=vmem, size = 0x2000, scoped, tag = 'output window, operand 0, single buffered']
    %8 = vsyncpa [#allocation3], 0
    %9 = vsyncpa [#allocation6], 0
    %10 = vsyncpa [#allocation4], 0
    // Predicated region
    $region2: #{tpu_custom_call.1} parent=1 // pred_check
      _
    $region3: #{tpu_custom_call.1} parent=1 // pred_check_branch
      %12 = sbr.rel (0) target = $region5
    $region4: #{tpu_custom_call.1} parent=1 // pred_region
      %s14 = ssub.s32 256, 256
      %15 = vsyncadd [#allocation3], %s14
      %s16 = sshll.u32 [#allocation2], 4
      %s17 = int_to_ptr.vmem [resolvable:$true] %s16
      %22 = dma.hbm_to_vmem [thread:$0]  %s0, 256, %s17, [#allocation3], 128, 128, 8
    $region5: #{tpu_custom_call.1} parent=1 // pred_fallthru
      _
    // Predicated region
    $region6: #{tpu_custom_call.1} parent=1 // pred_check
      _
    $region7: #{tpu_custom_call.1} parent=1 // pred_check_branch
      %24 = sbr.rel (0) target = $region9
    $region8: #{tpu_custom_call.1} parent=1 // pred_region
      %s26 = ssub.s32 512, 512
      %27 = vsyncadd [#allocation6], %s26
      %s28 = sshll.u32 [#allocation5], 4
      %s29 = int_to_ptr.vmem [resolvable:$true] %s28
      %34 = dma.hbm_to_vmem [thread:$0]  %s1, 512, %s29, [#allocation6], 128, 128, 8
    $region9: #{tpu_custom_call.1} parent=1 // pred_fallthru
      _
    // Predicated region
    $region10: #{tpu_custom_call.1} parent=1 // pred_check
      _
    $region11: #{tpu_custom_call.1} parent=1 // pred_check_branch
      %36 = sbr.rel (0) target = $region13
    $region12: #{tpu_custom_call.1} parent=1 // pred_region
      _
    $region13: #{tpu_custom_call.1} parent=1 // pred_fallthru
      _
    // Predicated region
    $region14: #{tpu_custom_call.1} parent=1 // pred_check
      _
    $region15: #{tpu_custom_call.1} parent=1 // pred_check_branch
      %38 = sbr.rel (0) target = $region17
    $region16: #{tpu_custom_call.1} parent=1 // pred_region
      %39 = dma.done [#allocation3], 256
    $region17: #{tpu_custom_call.1} parent=1 // pred_fallthru
      _
    // Predicated region
    $region18: #{tpu_custom_call.1} parent=1 // pred_check
      _
    $region19: #{tpu_custom_call.1} parent=1 // pred_check_branch
      %41 = sbr.rel (0) target = $region21
    $region20: #{tpu_custom_call.1} parent=1 // pred_region
      %42 = dma.done [#allocation6], 512
    $region21: #{tpu_custom_call.1} parent=1 // pred_fallthru
      _
    %v43 = vld [vmem:[#allocation2] sm:$0xff]
    %v44 = vld [vmem:[#allocation2 + $0x8] sm:$0xff]
    %v45 = vld [vmem:[#allocation5] sm:$0xff]
    %v46 = vld [vmem:[#allocation5 + $0x8] sm:$0xff]
    %v47 = vld [vmem:[#allocation5 + $0x10] sm:$0xff]
    %v48 = vld [vmem:[#allocation5 + $0x18] sm:$0xff]
    %v49 = vld [vmem:[%s2] sm:$0x1]
    %v51 = vlaneseq
    %v52 = vshrl.u32 %v51, 7
    %v53 = vsub.s32 0, %v52
    %v54 = vrot.slane %v49, %v53
    %vm56 = vcmask 261120
    %v58 = vsel %vm56, %v43, 0
    %v61 = vsel %vm56, %v44, 0
    %63 = vmatprep.subr.mxu0 0.0
    %64 = vmatpush1.msra.mxu0 %v45
    %65 = vmatprep.subr.mxu0 0.0
    %66 = vmatpush1.msra.mxu0 %v46
    %67 = vmatprep.subr.mxu0 0.0
    %68 = vmatpush1.msra.mxu0 %v47
    %69 = vmatprep.subr.mxu0 0.0
    %70 = vmatpush1.msra.mxu0 %v48
    %71 = vmatprep.subr.mxu0 0.0
    %72 = vmatpush1.msra.mxu0 0.0
    %73 = vmatprep.subr.mxu0 0.0
    %74 = vmatpush1.msra.mxu0 0.0
    %75 = vmatprep.subr.mxu0 0.0
    %76 = vmatpush1.msra.mxu0 0.0
    %77 = vmatprep.subr.mxu0 0.0
    %78 = vmatpush1.msra.mxu0 0.0
    %79 = vmatprep.subr.mxu0 0.0
    %80 = vmatpush1.msra.mxu0 0.0
    %81 = vmatprep.subr.mxu0 0.0
    %82 = vmatpush1.msra.mxu0 0.0
    %83 = vmatprep.subr.mxu0 0.0
    %84 = vmatpush1.msra.mxu0 0.0
    %85 = vmatprep.subr.mxu0 0.0
    %86 = vmatpush1.msra.mxu0 0.0
    %87 = vmatprep.subr.mxu0 0.0
    %88 = vmatpush1.msra.mxu0 0.0
    %89 = vmatprep.subr.mxu0 0.0
    %90 = vmatpush1.msra.mxu0 0.0
    %91 = vmatprep.subr.mxu0 0.0
    %92 = vmatpush1.msra.mxu0 0.0
    %93 = vmatprep.subr.mxu0 0.0
    %94 = vmatpush1.msra.mxu0 0.0
    %95 = vmatprep.subr.mxu0 0.0
    %96 = vmatpush1.msra.mxu0 0.0
    %97 = vmatprep.subr.mxu0 0.0
    %98 = vmatpush1.msra.mxu0 0.0
    %99 = vmatprep.subr.mxu0 0.0
    %100 = vmatpush1.msra.mxu0 0.0
    %101 = vmatprep.subr.mxu0 0.0
    %102 = vmatpush1.msra.mxu0 0.0
    %103 = vmatprep.subr.mxu0 0.0
    %104 = vmatpush1.msra.mxu0 0.0
    %105 = vmatprep.subr.mxu0 0.0
    %106 = vmatpush1.msra.mxu0 0.0
    %107 = vmatprep.subr.mxu0 0.0
    %108 = vmatpush1.msra.mxu0 0.0
    %109 = vmatprep.subr.mxu0 0.0
    %110 = vmatpush1.msra.mxu0 0.0
    %111 = vmatprep.subr.mxu0 0.0
    %112 = vmatpush1.msra.mxu0 0.0
    %113 = vmatprep.subr.mxu0 0.0
    %114 = vmatpush1.msra.mxu0 0.0
    %115 = vmatprep.subr.mxu0 0.0
    %116 = vmatpush1.msra.mxu0 0.0
    %117 = vmatprep.subr.mxu0 0.0
    %118 = vmatpush1.msra.mxu0 0.0
    %119 = vmatprep.subr.mxu0 0.0
    %120 = vmatpush1.msra.mxu0 0.0
    %121 = vmatprep.subr.mxu0 0.0
    %122 = vmatpush1.msra.mxu0 0.0
    %123 = vmatprep.subr.mxu0 0.0
    %124 = vmatpush1.msra.mxu0 0.0
    %125 = vmatprep.subr.mxu0 0.0
    %126 = vmatpush1.msra.mxu0 0.0
    %127 = vmatprep.mubr.f32.mxu0 0.0
    %128 = vmatmul.mubr.f32.gmra.mrb[0].mxu0 %v58
    %v129 = vpop.f32.mrb[0].mxu0
    %v130 = vadd.f32 %v54, %v129
    %v131 = vpop.f32.mrb[0].mxu0
    %132 = vmatprep.mubr.f32.mxu0 0.0
    %133 = vmatmul.mubr.f32.gmra.mrb[0].mxu0 %v61
    %v134 = vpop.f32.mrb[0].mxu0
    %v135 = vadd.f32 %v54, %v134
    %v136 = vpop.f32.mrb[0].mxu0
    %137 = vdwg.mxu0
    %vm138 = vcmask 785408
    %139 = vst.msk [vmem:[#allocation7] sm:$0xff] %vm138, %v130
    %140 = vst.msk [vmem:[#allocation7 + $0x8] sm:$0xff] %vm138, %v135
    // Predicated region
    $region22: #{tpu_custom_call.1} parent=1 // pred_check
      _
    $region23: #{tpu_custom_call.1} parent=1 // pred_check_branch
      %142 = sbr.rel (0) target = $region25
    $region24: #{tpu_custom_call.1} parent=1 // pred_region
      %s144 = ssub.s32 256, 256
      %145 = vsyncadd [#allocation4], %s144
      %s146 = sshll.u32 [#allocation7], 4
      %s147 = int_to_ptr.vmem [resolvable:$true] %s146
      %152 = dma.vmem_to_hbm [thread:$0]  %s147, 256, %s3, [#allocation4], 128, 128, 8
    $region25: #{tpu_custom_call.1} parent=1 // pred_fallthru
      _
    // Predicated region
    $region26: #{tpu_custom_call.1} parent=1 // pred_check
      _
    $region27: #{tpu_custom_call.1} parent=1 // pred_check_branch
      %154 = sbr.rel (0) target = $region29
    $region28: #{tpu_custom_call.1} parent=1 // pred_region
      %155 = dma.done [#allocation4], 256
    $region29: #{tpu_custom_call.1} parent=1 // pred_fallthru
      _
    %156 = vsyncpa [#allocation3], 1
    %157 = vsyncpa [#allocation6], 1
    %158 = vsyncpa [#allocation4], 1

</llo_original>
